<compile_context>
chip_gen: v6e
topology: v6e:2x2x1
jax: 0.10.0
libtpu: 0.0.40
codegen_flags: <defaults>
</compile_context>

<pallas_src>
import jax
import jax.numpy as jnp
from jax.experimental import pallas as pl
from jax.experimental.pallas import tpu as pltpu


# ----------------------------- Pallas kernel --------------------------------

def _bit_estimator_kernel(x_ref, p_ref, o_ref):
    """Fused f1->f2->f3->f4 Bitparm chain.

    x_ref: (1, ct, ht)   activations (channels on sublanes, H*W on lanes)
    p_ref: (ct, 11)      packed per-channel params:
                         cols 0..3  = softplus(h_1..4)
                         cols 4..7  = b_1..4
                         cols 8..10 = tanh(a_1..3)
    o_ref: (1, ct, ht)
    """
    x = x_ref[...].astype(jnp.float32)      # (1, ct, ht)
    p = p_ref[...].astype(jnp.float32)      # (ct, 11)

    for i in range(3):                      # f1, f2, f3
        sp = p[:, i:i + 1]                  # (ct, 1) broadcasts over lanes
        bb = p[:, 4 + i:5 + i]
        ta = p[:, 8 + i:9 + i]
        t = x * sp + bb
        x = t + jnp.tanh(t) * ta

    t = x * p[:, 3:4] + p[:, 7:8]           # f4 (final=True)
    # sigmoid(t) == 0.5 * (tanh(0.5 * t) + 1): EUP tanh instead of VPU divide.
    o_ref[...] = (0.5 * (jnp.tanh(0.5 * t) + 1.0)).astype(o_ref.dtype)


# ------------------------------ wrapper --------------------------------------

def _pick_tile(dim, align, max_tile):
    """Largest tile <= max_tile that is a multiple of `align`, or the full dim."""
    if dim <= align:
        return dim                       # full-dim exception of the (8,128) rule
    t = max(align, min(dim, max_tile))
    return (t // align) * align


def bit_estimator_forward(x_nchw, params, *, block_bytes=2 << 20):
    """x_nchw: (B, C, H, W); params: (h (4,C), b (4,C), a (3,C))."""
    h, b, a = params
    B, C, H, W = x_nchw.shape
    HW = H * W

    # Native-layout view: contiguous NCHW -> (B, C, H*W) is a free reshape.
    x3 = x_nchw.reshape(B, C, HW)

    # Precompute the per-channel transcendentals once (tiny) and pack:
    # (C, 11) = [softplus(h_1..4) | b_1..4 | tanh(a_1..3)] per channel row.
    sp_h = jax.nn.softplus(h.astype(jnp.float32))        # (4, C)
    th_a = jnp.tanh(a.astype(jnp.float32))               # (3, C)
    p = jnp.concatenate([sp_h, b.astype(jnp.float32), th_a], axis=0).T  # (C, 11)

    # Tile selection: lanes as wide as possible (multiple of 128, up to 8192),
    # then enough channel rows to reach ~block_bytes per input block.
    itemsize = jnp.dtype(x_nchw.dtype).itemsize
    ht = _pick_tile(HW, 128, 8192)
    target_elems = max(1, block_bytes // itemsize)
    ct = _pick_tile(C, 8, max(1, target_elems // ht))

    # Keep >= 2 grid steps so v7x's two TensorCores both get work.
    if B * pl.cdiv(C, ct) * pl.cdiv(HW, ht) < 2:
        if ht % 256 == 0:
            ht //= 2
        elif ct % 16 == 0:
            ct //= 2

    grid = (B, pl.cdiv(C, ct), pl.cdiv(HW, ht))

    out = pl.pallas_call(
        _bit_estimator_kernel,
        out_shape=jax.ShapeDtypeStruct((B, C, HW), x_nchw.dtype),
        grid_spec=pltpu.PrefetchScalarGridSpec(
            num_scalar_prefetch=0,
            grid=grid,
            in_specs=[
                pl.BlockSpec((1, ct, ht), lambda bi, ci, hi: (bi, ci, hi)),
                pl.BlockSpec((ct, 11), lambda bi, ci, hi: (ci, 0)),
            ],
            out_specs=pl.BlockSpec((1, ct, ht), lambda bi, ci, hi: (bi, ci, hi)),
        ),
        compiler_params=pltpu.CompilerParams(
            dimension_semantics=("parallel", "parallel", "parallel"),
            vmem_limit_bytes=32 * 1024 * 1024,
        ),
    )(x3, p)

    return out.reshape(B, C, H, W)


# ------------------------------ reference ------------------------------------

def _ref_forward(x_nchw, params):
    """Pure-JAX reference mirroring the PyTorch BitEstimator forward."""
    h, b, a = params
    C = x_nchw.shape[1]
    bc = lambda q: q.reshape(1, C, 1, 1)
    x = x_nchw
    for i in range(3):
        t = x * jax.nn.softplus(bc(h[i])) + bc(b[i])
        x = t + jnp.tanh(t) * jnp.tanh(bc(a[i]))
    t = x * jax.nn.softplus(bc(h[3])) + bc(b[3])
    return jax.nn.sigmoid(t)


def init_params(key, channel):
    """PyTorch init: Normal(0, 0.01) for h, b, a of each Bitparm."""
    kh, kb, ka = jax.random.split(key, 3)
    h = 0.01 * jax.random.normal(kh, (4, channel), jnp.float32)
    b = 0.01 * jax.random.normal(kb, (4, channel), jnp.float32)
    a = 0.01 * jax.random.normal(ka, (3, channel), jnp.float32)
    return h, b, a


# --------------------------------- main ---------------------------------------

if __name__ == "__main__":
    key = jax.random.PRNGKey(0)
    pkey, xkey = jax.random.split(key)

    B, C, H, W = 2, 64, 16, 16
    params = init_params(pkey, C)
    x = jax.random.normal(xkey, (B, C, H, W), jnp.float32)

    out = jax.block_until_ready(bit_estimator_forward(x, params))
    assert out.shape == x.shape, out.shape

    ref = jax.block_until_ready(_ref_forward(x, params))
    assert jnp.allclose(out, ref, atol=1e-5, rtol=1e-5), float(jnp.max(jnp.abs(out - ref)))

    print("KERNEL_OK")
</pallas_src>

<mosaic_0001>
module attributes {stable_mosaic.version = 11 : i64} {
  func.func @_bit_estimator_kernel(%arg0: i32, %arg1: i32, %arg2: i32, %arg3: memref<1x64x256xf32, #tpu.memory_space<vmem>>, %arg4: memref<64x11xf32, #tpu.memory_space<vmem>>, %arg5: memref<1x64x256xf32, #tpu.memory_space<vmem>>) attributes {dimension_semantics = [#tpu.dimension_semantics<parallel>, #tpu.dimension_semantics<parallel>, #tpu.dimension_semantics<parallel>], iteration_bounds = array<i64: 2, 1, 1>, scalar_prefetch = 0 : i64, scratch_operands = 0 : i64, tpu.core_type = #tpu.core_type<tc>, window_params = [{transform_indices = @transform_0, window_bounds = array<i64: 1, 64, 256>}, {transform_indices = @transform_1, window_bounds = array<i64: 64, 11>}, {transform_indices = @transform_2, window_bounds = array<i64: 1, 64, 256>}]} {
    %c0 = arith.constant 0 : index
    %c0_0 = arith.constant 0 : index
    %c0_1 = arith.constant 0 : index
    %0 = vector.load %arg3[%c0, %c0_0, %c0_1] : memref<1x64x256xf32, #tpu.memory_space<vmem>>, vector<1x64x256xf32>
    %c0_2 = arith.constant 0 : index
    %c0_3 = arith.constant 0 : index
    %1 = vector.load %arg4[%c0_2, %c0_3] : memref<64x11xf32, #tpu.memory_space<vmem>>, vector<64x11xf32>
    %2 = vector.extract_strided_slice %1 {offsets = [0, 0], sizes = [64, 1], strides = [1, 1]} : vector<64x11xf32> to vector<64x1xf32>
    %3 = vector.extract_strided_slice %1 {offsets = [0, 4], sizes = [64, 1], strides = [1, 1]} : vector<64x11xf32> to vector<64x1xf32>
    %4 = vector.extract_strided_slice %1 {offsets = [0, 8], sizes = [64, 1], strides = [1, 1]} : vector<64x11xf32> to vector<64x1xf32>
    %5 = vector.shape_cast %2 : vector<64x1xf32> to vector<1x64x1xf32>
    %6 = vector.broadcast %5 : vector<1x64x1xf32> to vector<1x64x256xf32>
    %7 = arith.mulf %0, %6 : vector<1x64x256xf32>
    %8 = vector.shape_cast %3 : vector<64x1xf32> to vector<1x64x1xf32>
    %9 = vector.broadcast %8 : vector<1x64x1xf32> to vector<1x64x256xf32>
    %10 = arith.addf %7, %9 : vector<1x64x256xf32>
    %11 = math.tanh %10 : vector<1x64x256xf32>
    %12 = vector.shape_cast %4 : vector<64x1xf32> to vector<1x64x1xf32>
    %13 = vector.broadcast %12 : vector<1x64x1xf32> to vector<1x64x256xf32>
    %14 = arith.mulf %11, %13 : vector<1x64x256xf32>
    %15 = arith.addf %10, %14 : vector<1x64x256xf32>
    %16 = vector.extract_strided_slice %1 {offsets = [0, 1], sizes = [64, 1], strides = [1, 1]} : vector<64x11xf32> to vector<64x1xf32>
    %17 = vector.extract_strided_slice %1 {offsets = [0, 5], sizes = [64, 1], strides = [1, 1]} : vector<64x11xf32> to vector<64x1xf32>
    %18 = vector.extract_strided_slice %1 {offsets = [0, 9], sizes = [64, 1], strides = [1, 1]} : vector<64x11xf32> to vector<64x1xf32>
    %19 = vector.shape_cast %16 : vector<64x1xf32> to vector<1x64x1xf32>
    %20 = vector.broadcast %19 : vector<1x64x1xf32> to vector<1x64x256xf32>
    %21 = arith.mulf %15, %20 : vector<1x64x256xf32>
    %22 = vector.shape_cast %17 : vector<64x1xf32> to vector<1x64x1xf32>
    %23 = vector.broadcast %22 : vector<1x64x1xf32> to vector<1x64x256xf32>
    %24 = arith.addf %21, %23 : vector<1x64x256xf32>
    %25 = math.tanh %24 : vector<1x64x256xf32>
    %26 = vector.shape_cast %18 : vector<64x1xf32> to vector<1x64x1xf32>
    %27 = vector.broadcast %26 : vector<1x64x1xf32> to vector<1x64x256xf32>
    %28 = arith.mulf %25, %27 : vector<1x64x256xf32>
    %29 = arith.addf %24, %28 : vector<1x64x256xf32>
    %30 = vector.extract_strided_slice %1 {offsets = [0, 2], sizes = [64, 1], strides = [1, 1]} : vector<64x11xf32> to vector<64x1xf32>
    %31 = vector.extract_strided_slice %1 {offsets = [0, 6], sizes = [64, 1], strides = [1, 1]} : vector<64x11xf32> to vector<64x1xf32>
    %32 = vector.extract_strided_slice %1 {offsets = [0, 10], sizes = [64, 1], strides = [1, 1]} : vector<64x11xf32> to vector<64x1xf32>
    %33 = vector.shape_cast %30 : vector<64x1xf32> to vector<1x64x1xf32>
    %34 = vector.broadcast %33 : vector<1x64x1xf32> to vector<1x64x256xf32>
    %35 = arith.mulf %29, %34 : vector<1x64x256xf32>
    %36 = vector.shape_cast %31 : vector<64x1xf32> to vector<1x64x1xf32>
    %37 = vector.broadcast %36 : vector<1x64x1xf32> to vector<1x64x256xf32>
    %38 = arith.addf %35, %37 : vector<1x64x256xf32>
    %39 = math.tanh %38 : vector<1x64x256xf32>
    %40 = vector.shape_cast %32 : vector<64x1xf32> to vector<1x64x1xf32>
    %41 = vector.broadcast %40 : vector<1x64x1xf32> to vector<1x64x256xf32>
    %42 = arith.mulf %39, %41 : vector<1x64x256xf32>
    %43 = arith.addf %38, %42 : vector<1x64x256xf32>
    %44 = vector.extract_strided_slice %1 {offsets = [0, 3], sizes = [64, 1], strides = [1, 1]} : vector<64x11xf32> to vector<64x1xf32>
    %45 = vector.shape_cast %44 : vector<64x1xf32> to vector<1x64x1xf32>
    %46 = vector.broadcast %45 : vector<1x64x1xf32> to vector<1x64x256xf32>
    %47 = arith.mulf %43, %46 : vector<1x64x256xf32>
    %48 = vector.extract_strided_slice %1 {offsets = [0, 7], sizes = [64, 1], strides = [1, 1]} : vector<64x11xf32> to vector<64x1xf32>
    %49 = vector.shape_cast %48 : vector<64x1xf32> to vector<1x64x1xf32>
    %50 = vector.broadcast %49 : vector<1x64x1xf32> to vector<1x64x256xf32>
    %51 = arith.addf %47, %50 : vector<1x64x256xf32>
    %cst = arith.constant 5.000000e-01 : f32
    %52 = vector.broadcast %cst : f32 to vector<1x64x256xf32>
    %53 = arith.mulf %52, %51 : vector<1x64x256xf32>
    %54 = math.tanh %53 : vector<1x64x256xf32>
    %cst_4 = arith.constant 1.000000e+00 : f32
    %55 = vector.broadcast %cst_4 : f32 to vector<1x64x256xf32>
    %56 = arith.addf %54, %55 : vector<1x64x256xf32>
    %cst_5 = arith.constant 5.000000e-01 : f32
    %57 = vector.broadcast %cst_5 : f32 to vector<1x64x256xf32>
    %58 = arith.mulf %57, %56 : vector<1x64x256xf32>
    %c0_6 = arith.constant 0 : index
    %c0_7 = arith.constant 0 : index
    %c0_8 = arith.constant 0 : index
    %59 = vector.load %arg5[%c0_6, %c0_7, %c0_8] : memref<1x64x256xf32, #tpu.memory_space<vmem>>, vector<1x64x256xf32>
    tpu.vector_store %arg5[%c0_6, %c0_7, %c0_8], %58 {strides = array<i32>} : memref<1x64x256xf32, #tpu.memory_space<vmem>>, vector<1x64x256xf32>,
    return
  }
  func.func @transform_0(%arg0: i32, %arg1: i32, %arg2: i32) -> (i32, i32, i32) {
    %c0_i32 = arith.constant 0 : i32
    return %arg0, %arg1, %arg2 : i32, i32, i32
  }
  func.func @transform_1(%arg0: i32, %arg1: i32, %arg2: i32) -> (i32, i32) {
    %c0_i32 = arith.constant 0 : i32
    %c0_i32_0 = arith.constant 0 : i32
    return %arg1, %c0_i32 : i32, i32
  }
  func.func @transform_2(%arg0: i32, %arg1: i32, %arg2: i32) -> (i32, i32, i32) {
    %c0_i32 = arith.constant 0 : i32
    return %arg0, %arg1, %arg2 : i32, i32, i32
  }
}

</mosaic_0001>

<llo_original>
// kernel: tpu_custom_call.1
$region0: #{tpu_custom_call.1}
  #allocation0 [shape = 'u32[]', space=smem, size = 0x4, offset = 0x4, fixed_abs, tag = 'smem constant byte address 0x4 - core index']
  #allocation1 [shape = 'u32[144,128]{1,0:T(1,128)}', space=vmem, size = 0x12000, scoped, tag = 'internal scratch']
  %s0 = inlined_call_operand.hbm [shape: f32[2,64,256], index: 0, kind: input, shape index: {}]
  %s1 = inlined_call_operand.vmem [shape: f32[64,11], index: 1, kind: input, shape index: {}]
  %s2 = inlined_call_operand.hbm [shape: f32[2,64,256], index: 2, kind: output, shape index: {}]
  %s3 = sld [smem:[#allocation0]]
  $region45: #{tpu_custom_call.1} parent=0
    _
  %s5 = ssub.s32 1, %s3
  %s6 = scalar_select 0, %s5, %s3
  $region1: #{tpu_custom_call.1} parent=0
    #allocation2 [shape = 'u8[131072]{0}', space=vmem, size = 0x20000, scoped, tag = 'input window, operand 0']
    #allocation3 [shape = 's32[2]{0}', space=sflag, size = 0x8, scoped, tag = 'scoped memory for tpu_custom_call.1']
    #allocation4 [shape = 's32[2]{0}', space=sflag, size = 0x8, scoped, tag = 'scoped memory for tpu_custom_call.1']
    #allocation5 [shape = 'u8[131072]{0}', space=vmem, size = 0x20000, scoped, tag = 'output window, operand 0']
    %7 = vsyncpa [#allocation3], 0
    %s8 = scalar_lea.sflag [#allocation3], 1
    %9 = vsyncpa %s8, 0
    %10 = vsyncpa [#allocation4], 0
    %s11 = scalar_lea.sflag [#allocation4], 1
    %12 = vsyncpa %s11, 0
    loop: start=0, step=1, limit=4
    $region2: #{tpu_custom_call.1} parent=1 // loop_pre_header
      _
    $region3: #{tpu_custom_call.1} parent=1 // loop_header
      %s14 = sphi 0, %s18
      %p15 = scmp.ge.s32.totalorder %s14, 4
      %s21 = sphi 0, %s40
      %s22 = sphi 0, %s36
      %s23 = sphi 0, %s32
      %s24 = sphi 0, %s21
      %s25 = sphi 0, %s22
      %s26 = sphi 0, %s23
      %s27 = sphi 0, %s24
      %s28 = sphi 0, %s25
      %s29 = sphi 0, %s26
      %s47 = sphi 0, %s49
      %s50 = sphi 0, %s47
      %s51 = sphi 0, %s50
      %s67 = sphi 0, %s51
      %s73 = sphi 0, %s75
      %s76 = sphi 0, %s73
      %s77 = sphi 0, %s76
      %s93 = sphi 0, %s77
      %s103 = sphi 0, %s105
      %s106 = sphi 0, %s103
      %s107 = sphi 0, %s106
      %s123 = sphi 0, %s107
    $region4: #{tpu_custom_call.1} parent=1 // loop_header_branch
      %17 = sbr.rel (%p15) target = $region8
    $region5: #{tpu_custom_call.1} parent=1 // loop_body
      %s19 = ssub.s32 %s14, 1
      %s20 = ssub.s32 %s14, 2
      %s30 = sadd.s32 1, %s23
      %p31 = scmp.ge.s32.totalorder %s30, 1
      %s32 = scalar_select %p31, 0, %s30
      %s33 = sadd.s32 1, %s22
      %s34 = scalar_select %p31, %s33, %s22
      %p35 = scmp.ge.s32.totalorder %s34, 1
      %s36 = scalar_select %p35, 0, %s34
      %s37 = sadd.s32 1, %s21
      %s38 = scalar_select %p35, %s37, %s21
      %p39 = scmp.ge.s32.totalorder %s38, 2
      %s40 = scalar_select %p39, 0, %s38
      %s41 = ssub.s32 %s21, %s40
      %s42 = ssub.s32 %s22, %s36
      %s43 = sor.u32 %s41, %s42
      %s44 = ssub.s32 %s23, %s32
      %s45 = sor.u32 %s43, %s44
      %p46 = scmp.eq.s32.totalorder %s45, 0
      %s48 = sadd.s32 %s47, 1
      %s49 = scalar_select %p46, %s47, %s48
      %p52 = pneg %p46
      %p53 = scmp.eq.s32.totalorder %s14, 1
      %p54 = por %p52, %p53
      %p55 = scmp.ne.s32.totalorder %s47, %s50
      %p56 = scmp.eq.s32.totalorder %s14, 0
      %p57 = por %p55, %p56
      %p58 = scmp.ne.s32.totalorder %s47, %s50
      %p59 = scmp.eq.s32.totalorder %s19, 1
      %p60 = por %p58, %p59
      %p61 = scmp.ne.s32.totalorder %s50, %s51
      %p62 = scmp.eq.s32.totalorder %s19, 0
      %p63 = por %p61, %p62
      %p64 = scmp.ne.s32.totalorder %s50, %s51
      %p65 = scmp.eq.s32.totalorder %s20, 1
      %p66 = por %p64, %p65
      %p68 = scmp.ne.s32.totalorder %s51, %s67
      %p69 = scmp.eq.s32.totalorder %s20, 0
      %p70 = por %p68, %p69
      %s71 = ssub.s32 %s22, %s36
      %p72 = scmp.eq.s32.totalorder %s71, 0
      %s74 = sadd.s32 %s73, 1
      %s75 = scalar_select %p72, %s73, %s74
      %p78 = pneg %p72
      %p79 = scmp.eq.s32.totalorder %s14, 1
      %p80 = por %p78, %p79
      %p81 = scmp.ne.s32.totalorder %s73, %s76
      %p82 = scmp.eq.s32.totalorder %s14, 0
      %p83 = por %p81, %p82
      %p84 = scmp.ne.s32.totalorder %s73, %s76
      %p85 = scmp.eq.s32.totalorder %s19, 1
      %p86 = por %p84, %p85
      %p87 = scmp.ne.s32.totalorder %s76, %s77
      %p88 = scmp.eq.s32.totalorder %s19, 0
      %p89 = por %p87, %p88
      %p90 = scmp.ne.s32.totalorder %s76, %s77
      %p91 = scmp.eq.s32.totalorder %s20, 1
      %p92 = por %p90, %p91
      %p94 = scmp.ne.s32.totalorder %s77, %s93
      %p95 = scmp.eq.s32.totalorder %s20, 0
      %p96 = por %p94, %p95
      %s97 = ssub.s32 %s21, %s40
      %s98 = ssub.s32 %s22, %s36
      %s99 = sor.u32 %s97, %s98
      %s100 = ssub.s32 %s23, %s32
      %s101 = sor.u32 %s99, %s100
      %p102 = scmp.eq.s32.totalorder %s101, 0
      %s104 = sadd.s32 %s103, 1
      %s105 = scalar_select %p102, %s103, %s104
      %p108 = pneg %p102
      %p109 = scmp.eq.s32.totalorder %s14, 1
      %p110 = por %p108, %p109
      %p111 = scmp.ne.s32.totalorder %s103, %s106
      %p112 = scmp.eq.s32.totalorder %s14, 0
      %p113 = por %p111, %p112
      %p114 = scmp.ne.s32.totalorder %s103, %s106
      %p115 = scmp.eq.s32.totalorder %s19, 1
      %p116 = por %p114, %p115
      %p117 = scmp.ne.s32.totalorder %s106, %s107
      %p118 = scmp.eq.s32.totalorder %s19, 0
      %p119 = por %p117, %p118
      %p120 = scmp.ne.s32.totalorder %s106, %s107
      %p121 = scmp.eq.s32.totalorder %s20, 1
      %p122 = por %p120, %p121
      %p124 = scmp.ne.s32.totalorder %s107, %s123
      %p125 = scmp.eq.s32.totalorder %s20, 0
      %p126 = por %p124, %p125
      %p127 = scmp.le.s32.totalorder 1, %s14
      %p128 = scmp.lt.s32.totalorder %s14, 3
      %p129 = pnand %p127, %p128
      %p130 = pneg %p129
      // Predicated region
      $region9: #{tpu_custom_call.1} parent=5 // pred_check
        _
      $region10: #{tpu_custom_call.1} parent=5 // pred_check_branch
        %132 = sbr.rel (%p129) target = $region12
      $region11: #{tpu_custom_call.1} parent=5 // pred_region
        %s133 = ssub.s32 %s14, 1
        // Predicated region
        $region13: #{tpu_custom_call.1} parent=11 // pred_check
          %p134 = pneg %p89
        $region14: #{tpu_custom_call.1} parent=11 // pred_check_branch
          %136 = sbr.rel (%p134) target = $region16
        $region15: #{tpu_custom_call.1} parent=11 // pred_region
          %s137 = smul.u32 8, %s25
          %p138 = scmp.lt.s32.totalorder %s137, 7
          %s139 = scalar_select %p138, %s137, 7
          %s140 = smul.addr %s139, 8
          %s141 = scalar_lea.vmem %s1, %s140
          %s142 = smul.u32 8, %s25
        $region16: #{tpu_custom_call.1} parent=11 // pred_fallthru
          _
      $region12: #{tpu_custom_call.1} parent=5 // pred_fallthru
        _
      %p143 = scmp.lt.s32.totalorder %s14, 2
      // Predicated region
      $region17: #{tpu_custom_call.1} parent=5 // pred_check
        %p144 = pneg %p143
      $region18: #{tpu_custom_call.1} parent=5 // pred_check_branch
        %146 = sbr.rel (%p144) target = $region20
      $region19: #{tpu_custom_call.1} parent=5 // pred_region
        // Predicated region
        $region21: #{tpu_custom_call.1} parent=19 // pred_check
          %p147 = pneg %p57
        $region22: #{tpu_custom_call.1} parent=19 // pred_check_branch
          %149 = sbr.rel (%p147) target = $region24
        $region23: #{tpu_custom_call.1} parent=19 // pred_region
          %s150 = sand.u32 %s47, 1
          %s151 = scalar_lea.sflag [#allocation3], %s150
          %s152 = sand.u32 %s47, 1
          %s153 = smul.addr %s152, 128
          %s154 = scalar_lea.vmem [#allocation2], %s153
          %s155 = smul.u32 8, %s22
          %s156 = smul.u32 2, %s23
          %s158 = ssub.s32 2048, 2048
          %159 = vsyncadd %s151, %s158
          %s160 = smul.addr %s155, 2
          %s161 = sadd.s32 %s156, %s160
          %s162 = smul.addr %s21, 16
          %s163 = sadd.s32 %s161, %s162
          %s164 = smul.addr %s163, 128
          %s165 = scalar_lea.hbm %s0, %s164
          %s166 = sshll.u32 %s154, 4
          %s167 = int_to_ptr.vmem [resolvable:$true] %s166
          %172 = dma.hbm_to_vmem [thread:$0]  %s165, 2048, %s167, %s151, 256, 256, 16
        $region24: #{tpu_custom_call.1} parent=19 // pred_fallthru
          _
      $region20: #{tpu_custom_call.1} parent=5 // pred_fallthru
        _
      %p173 = scmp.le.s32.totalorder 1, %s14
      %p174 = scmp.lt.s32.totalorder %s14, 3
      %p175 = pnand %p173, %p174
      %p176 = pneg %p175
      // Predicated region
      $region25: #{tpu_custom_call.1} parent=5 // pred_check
        _
      $region26: #{tpu_custom_call.1} parent=5 // pred_check_branch
        %178 = sbr.rel (%p175) target = $region28
      $region27: #{tpu_custom_call.1} parent=5 // pred_region
        %s179 = ssub.s32 %s14, 1
        %s180 = sand.u32 %s50, 1
        %s181 = scalar_lea.sflag [#allocation3], %s180
        %s182 = sand.u32 %s50, 1
        %s183 = smul.addr %s182, 128
        %s184 = scalar_lea.vmem [#allocation2], %s183
        // Predicated region
        $region29: #{tpu_custom_call.1} parent=27 // pred_check
          %p185 = pneg %p63
        $region30: #{tpu_custom_call.1} parent=27 // pred_check_branch
          %187 = sbr.rel (%p185) target = $region32
        $region31: #{tpu_custom_call.1} parent=27 // pred_region
          %188 = dma.done %s181, 2048
        $region32: #{tpu_custom_call.1} parent=27 // pred_fallthru
          _
        %s189 = sand.u32 %s50, 1
        %s190 = scalar_lea.sflag [#allocation3], %s189
        %s191 = sand.u32 %s50, 1
        %s192 = smul.addr %s191, 128
        %s193 = scalar_lea.vmem [#allocation2], %s192
        %p194 = pneg %p63
        %p195 = pneg %p60
        %s196 = smul.u32 8, %s25
        %p197 = scmp.lt.s32.totalorder %s196, 7
        %s198 = scalar_select %p197, %s196, 7
        %s199 = smul.addr %s198, 8
        %s200 = scalar_lea.vmem %s1, %s199
        %p201 = pneg %p89
        %p202 = pneg %p86
        %p203 = pneg %p119
        %p204 = pneg %p116
        %s205 = sand.u32 %s106, 1
        %s206 = scalar_lea.sflag [#allocation4], %s205
        %s207 = sand.u32 %s106, 1
        %s208 = smul.addr %s207, 128
        %s209 = scalar_lea.vmem [#allocation5], %s208
        %s210 = smul.u32 8, %s25
        %s211 = smul.u32 2, %s26
        %s212 = smul.u32 8, %s25
        %p213 = scmp.lt.s32.totalorder %s212, 7
        %s214 = scalar_select %p213, %s212, 7
        %s215 = smul.addr %s214, 8
        %s216 = scalar_lea.vmem %s1, %s215
        %s217 = smul.u32 8, %s25
        %s218 = smul.u32 8, %s25
        %s219 = smul.u32 2, %s26
        %v220 = vld [vmem:[%s184] sm:$0xff]
        %v221 = vld [vmem:[%s184 + $0x8] sm:$0xff]
        %v222 = vld [vmem:[%s184 + $0x10] sm:$0xff]
        %v223 = vld [vmem:[%s184 + $0x18] sm:$0xff]
        %v224 = vld [vmem:[%s184 + $0x20] sm:$0xff]
        %v225 = vld [vmem:[%s184 + $0x28] sm:$0xff]
        %v226 = vld [vmem:[%s184 + $0x30] sm:$0xff]
        %v227 = vld [vmem:[%s184 + $0x38] sm:$0xff]
        %v228 = vld [vmem:[%s184 + $0x40] sm:$0xff]
        %v229 = vld [vmem:[%s184 + $0x48] sm:$0xff]
        %v230 = vld [vmem:[%s184 + $0x50] sm:$0xff]
        %v231 = vld [vmem:[%s184 + $0x58] sm:$0xff]
        %v232 = vld [vmem:[%s184 + $0x60] sm:$0xff]
        %v233 = vld [vmem:[%s184 + $0x68] sm:$0xff]
        %v234 = vld [vmem:[%s184 + $0x70] sm:$0xff]
        %v235 = vld [vmem:[%s184 + $0x78] sm:$0xff]
        %v236 = vld [vmem:[%s216] sm:$0xff]
        %v237 = vld [vmem:[%s216 + $0x8] sm:$0xff]
        %v238 = vld [vmem:[%s216 + $0x10] sm:$0xff]
        %v239 = vld [vmem:[%s216 + $0x18] sm:$0xff]
        %v240 = vld [vmem:[%s216 + $0x20] sm:$0xff]
        %v241 = vld [vmem:[%s216 + $0x28] sm:$0xff]
        %v242 = vld [vmem:[%s216 + $0x30] sm:$0xff]
        %v243 = vld [vmem:[%s216 + $0x38] sm:$0xff]
        %245 = vset.pattern.permute.xlu0 0
        %246 = vperm.xlu0 %245, %v236
        %v247 = vpop.permute.xlu0 %246
        %250 = vset.pattern.permute.xlu0 0
        %251 = vperm.xlu0 %250, %v237
        %v252 = vpop.permute.xlu0 %251
        %255 = vset.pattern.permute.xlu0 0
        %256 = vperm.xlu0 %255, %v238
        %v257 = vpop.permute.xlu0 %256
        %260 = vset.pattern.permute.xlu0 0
        %261 = vperm.xlu0 %260, %v239
        %v262 = vpop.permute.xlu0 %261
        %265 = vset.pattern.permute.xlu0 0
        %266 = vperm.xlu0 %265, %v240
        %v267 = vpop.permute.xlu0 %266
        %270 = vset.pattern.permute.xlu0 0
        %271 = vperm.xlu0 %270, %v241
        %v272 = vpop.permute.xlu0 %271
        %275 = vset.pattern.permute.xlu0 0
        %276 = vperm.xlu0 %275, %v242
        %v277 = vpop.permute.xlu0 %276
        %280 = vset.pattern.permute.xlu0 0
        %281 = vperm.xlu0 %280, %v243
        %v282 = vpop.permute.xlu0 %281
        %v284 = vmul.f32 %v220, %v247
        %v285 = vmul.f32 %v221, %v247
        %v286 = vmul.f32 %v222, %v252
        %v287 = vmul.f32 %v223, %v252
        %v288 = vmul.f32 %v224, %v257
        %v289 = vmul.f32 %v225, %v257
        %v290 = vmul.f32 %v226, %v262
        %v291 = vmul.f32 %v227, %v262
        %v292 = vmul.f32 %v228, %v267
        %v293 = vmul.f32 %v229, %v267
        %v294 = vmul.f32 %v230, %v272
        %v295 = vmul.f32 %v231, %v272
        %v296 = vmul.f32 %v232, %v277
        %v297 = vmul.f32 %v233, %v277
        %v298 = vmul.f32 %v234, %v282
        %v299 = vmul.f32 %v235, %v282
        %300 = vset.pattern.permute.xlu0 4
        %301 = vperm.xlu0 %300, %v236
        %v302 = vpop.permute.xlu0 %301
        %304 = vset.pattern.permute.xlu0 4
        %305 = vperm.xlu0 %304, %v237
        %v306 = vpop.permute.xlu0 %305
        %308 = vset.pattern.permute.xlu0 4
        %309 = vperm.xlu0 %308, %v238
        %v310 = vpop.permute.xlu0 %309
        %312 = vset.pattern.permute.xlu0 4
        %313 = vperm.xlu0 %312, %v239
        %v314 = vpop.permute.xlu0 %313
        %316 = vset.pattern.permute.xlu0 4
        %317 = vperm.xlu0 %316, %v240
        %v318 = vpop.permute.xlu0 %317
        %320 = vset.pattern.permute.xlu0 4
        %321 = vperm.xlu0 %320, %v241
        %v322 = vpop.permute.xlu0 %321
        %324 = vset.pattern.permute.xlu0 4
        %325 = vperm.xlu0 %324, %v242
        %v326 = vpop.permute.xlu0 %325
        %328 = vset.pattern.permute.xlu0 4
        %329 = vperm.xlu0 %328, %v243
        %v330 = vpop.permute.xlu0 %329
        %v332 = vadd.f32 %v284, %v302
        %v333 = vadd.f32 %v285, %v302
        %v334 = vadd.f32 %v286, %v306
        %v335 = vadd.f32 %v287, %v306
        %v336 = vadd.f32 %v288, %v310
        %v337 = vadd.f32 %v289, %v310
        %v338 = vadd.f32 %v290, %v314
        %v339 = vadd.f32 %v291, %v314
        %v340 = vadd.f32 %v292, %v318
        %v341 = vadd.f32 %v293, %v318
        %v342 = vadd.f32 %v294, %v322
        %v343 = vadd.f32 %v295, %v322
        %v344 = vadd.f32 %v296, %v326
        %v345 = vadd.f32 %v297, %v326
        %v346 = vadd.f32 %v298, %v330
        %v347 = vadd.f32 %v299, %v330
        %v348 = vtanh.pop %v332
        %v349 = vtanh.pop %v333
        %v350 = vtanh.pop %v334
        %v351 = vtanh.pop %v335
        %v352 = vtanh.pop %v336
        %v353 = vtanh.pop %v337
        %v354 = vtanh.pop %v338
        %v355 = vtanh.pop %v339
        %v356 = vtanh.pop %v340
        %v357 = vtanh.pop %v341
        %v358 = vtanh.pop %v342
        %v359 = vtanh.pop %v343
        %v360 = vtanh.pop %v344
        %v361 = vtanh.pop %v345
        %v362 = vtanh.pop %v346
        %v363 = vtanh.pop %v347
        %364 = vset.pattern.permute.xlu0 8
        %365 = vperm.xlu0 %364, %v236
        %v366 = vpop.permute.xlu0 %365
        %368 = vset.pattern.permute.xlu0 8
        %369 = vperm.xlu0 %368, %v237
        %v370 = vpop.permute.xlu0 %369
        %372 = vset.pattern.permute.xlu0 8
        %373 = vperm.xlu0 %372, %v238
        %v374 = vpop.permute.xlu0 %373
        %376 = vset.pattern.permute.xlu0 8
        %377 = vperm.xlu0 %376, %v239
        %v378 = vpop.permute.xlu0 %377
        %380 = vset.pattern.permute.xlu0 8
        %381 = vperm.xlu0 %380, %v240
        %v382 = vpop.permute.xlu0 %381
        %384 = vset.pattern.permute.xlu0 8
        %385 = vperm.xlu0 %384, %v241
        %v386 = vpop.permute.xlu0 %385
        %388 = vset.pattern.permute.xlu0 8
        %389 = vperm.xlu0 %388, %v242
        %v390 = vpop.permute.xlu0 %389
        %392 = vset.pattern.permute.xlu0 8
        %393 = vperm.xlu0 %392, %v243
        %v394 = vpop.permute.xlu0 %393
        %v396 = vmul.f32 %v348, %v366
        %v397 = vmul.f32 %v349, %v366
        %v398 = vmul.f32 %v350, %v370
        %v399 = vmul.f32 %v351, %v370
        %v400 = vmul.f32 %v352, %v374
        %v401 = vmul.f32 %v353, %v374
        %v402 = vmul.f32 %v354, %v378
        %v403 = vmul.f32 %v355, %v378
        %v404 = vmul.f32 %v356, %v382
        %v405 = vmul.f32 %v357, %v382
        %v406 = vmul.f32 %v358, %v386
        %v407 = vmul.f32 %v359, %v386
        %v408 = vmul.f32 %v360, %v390
        %v409 = vmul.f32 %v361, %v390
        %v410 = vmul.f32 %v362, %v394
        %v411 = vmul.f32 %v363, %v394
        %v412 = vadd.f32 %v332, %v396
        %v413 = vadd.f32 %v333, %v397
        %v414 = vadd.f32 %v334, %v398
        %v415 = vadd.f32 %v335, %v399
        %v416 = vadd.f32 %v336, %v400
        %v417 = vadd.f32 %v337, %v401
        %v418 = vadd.f32 %v338, %v402
        %v419 = vadd.f32 %v339, %v403
        %v420 = vadd.f32 %v340, %v404
        %v421 = vadd.f32 %v341, %v405
        %v422 = vadd.f32 %v342, %v406
        %v423 = vadd.f32 %v343, %v407
        %v424 = vadd.f32 %v344, %v408
        %v425 = vadd.f32 %v345, %v409
        %v426 = vadd.f32 %v346, %v410
        %v427 = vadd.f32 %v347, %v411
        %428 = vset.pattern.permute.xlu0 1
        %429 = vperm.xlu0 %428, %v236
        %v430 = vpop.permute.xlu0 %429
        %432 = vset.pattern.permute.xlu0 1
        %433 = vperm.xlu0 %432, %v237
        %v434 = vpop.permute.xlu0 %433
        %436 = vset.pattern.permute.xlu0 1
        %437 = vperm.xlu0 %436, %v238
        %v438 = vpop.permute.xlu0 %437
        %440 = vset.pattern.permute.xlu0 1
        %441 = vperm.xlu0 %440, %v239
        %v442 = vpop.permute.xlu0 %441
        %444 = vset.pattern.permute.xlu0 1
        %445 = vperm.xlu0 %444, %v240
        %v446 = vpop.permute.xlu0 %445
        %448 = vset.pattern.permute.xlu0 1
        %449 = vperm.xlu0 %448, %v241
        %v450 = vpop.permute.xlu0 %449
        %452 = vset.pattern.permute.xlu0 1
        %453 = vperm.xlu0 %452, %v242
        %v454 = vpop.permute.xlu0 %453
        %456 = vset.pattern.permute.xlu0 1
        %457 = vperm.xlu0 %456, %v243
        %v458 = vpop.permute.xlu0 %457
        %v460 = vmul.f32 %v412, %v430
        %v461 = vmul.f32 %v413, %v430
        %v462 = vmul.f32 %v414, %v434
        %v463 = vmul.f32 %v415, %v434
        %v464 = vmul.f32 %v416, %v438
        %v465 = vmul.f32 %v417, %v438
        %v466 = vmul.f32 %v418, %v442
        %v467 = vmul.f32 %v419, %v442
        %v468 = vmul.f32 %v420, %v446
        %v469 = vmul.f32 %v421, %v446
        %v470 = vmul.f32 %v422, %v450
        %v471 = vmul.f32 %v423, %v450
        %v472 = vmul.f32 %v424, %v454
        %v473 = vmul.f32 %v425, %v454
        %v474 = vmul.f32 %v426, %v458
        %v475 = vmul.f32 %v427, %v458
        %476 = vset.pattern.permute.xlu0 5
        %477 = vperm.xlu0 %476, %v236
        %v478 = vpop.permute.xlu0 %477
        %480 = vset.pattern.permute.xlu0 5
        %481 = vperm.xlu0 %480, %v237
        %v482 = vpop.permute.xlu0 %481
        %484 = vset.pattern.permute.xlu0 5
        %485 = vperm.xlu0 %484, %v238
        %v486 = vpop.permute.xlu0 %485
        %488 = vset.pattern.permute.xlu0 5
        %489 = vperm.xlu0 %488, %v239
        %v490 = vpop.permute.xlu0 %489
        %492 = vset.pattern.permute.xlu0 5
        %493 = vperm.xlu0 %492, %v240
        %v494 = vpop.permute.xlu0 %493
        %496 = vset.pattern.permute.xlu0 5
        %497 = vperm.xlu0 %496, %v241
        %v498 = vpop.permute.xlu0 %497
        %500 = vset.pattern.permute.xlu0 5
        %501 = vperm.xlu0 %500, %v242
        %v502 = vpop.permute.xlu0 %501
        %504 = vset.pattern.permute.xlu0 5
        %505 = vperm.xlu0 %504, %v243
        %v506 = vpop.permute.xlu0 %505
        %v508 = vadd.f32 %v460, %v478
        %v509 = vadd.f32 %v461, %v478
        %v510 = vadd.f32 %v462, %v482
        %v511 = vadd.f32 %v463, %v482
        %v512 = vadd.f32 %v464, %v486
        %v513 = vadd.f32 %v465, %v486
        %v514 = vadd.f32 %v466, %v490
        %v515 = vadd.f32 %v467, %v490
        %v516 = vadd.f32 %v468, %v494
        %v517 = vadd.f32 %v469, %v494
        %v518 = vadd.f32 %v470, %v498
        %v519 = vadd.f32 %v471, %v498
        %v520 = vadd.f32 %v472, %v502
        %v521 = vadd.f32 %v473, %v502
        %v522 = vadd.f32 %v474, %v506
        %v523 = vadd.f32 %v475, %v506
        %v524 = vtanh.pop %v508
        %v525 = vtanh.pop %v509
        %v526 = vtanh.pop %v510
        %v527 = vtanh.pop %v511
        %v528 = vtanh.pop %v512
        %v529 = vtanh.pop %v513
        %v530 = vtanh.pop %v514
        %v531 = vtanh.pop %v515
        %v532 = vtanh.pop %v516
        %v533 = vtanh.pop %v517
        %v534 = vtanh.pop %v518
        %v535 = vtanh.pop %v519
        %v536 = vtanh.pop %v520
        %v537 = vtanh.pop %v521
        %v538 = vtanh.pop %v522
        %v539 = vtanh.pop %v523
        %540 = vset.pattern.permute.xlu0 9
        %541 = vperm.xlu0 %540, %v236
        %v542 = vpop.permute.xlu0 %541
        %544 = vset.pattern.permute.xlu0 9
        %545 = vperm.xlu0 %544, %v237
        %v546 = vpop.permute.xlu0 %545
        %548 = vset.pattern.permute.xlu0 9
        %549 = vperm.xlu0 %548, %v238
        %v550 = vpop.permute.xlu0 %549
        %552 = vset.pattern.permute.xlu0 9
        %553 = vperm.xlu0 %552, %v239
        %v554 = vpop.permute.xlu0 %553
        %556 = vset.pattern.permute.xlu0 9
        %557 = vperm.xlu0 %556, %v240
        %v558 = vpop.permute.xlu0 %557
        %560 = vset.pattern.permute.xlu0 9
        %561 = vperm.xlu0 %560, %v241
        %v562 = vpop.permute.xlu0 %561
        %564 = vset.pattern.permute.xlu0 9
        %565 = vperm.xlu0 %564, %v242
        %v566 = vpop.permute.xlu0 %565
        %568 = vset.pattern.permute.xlu0 9
        %569 = vperm.xlu0 %568, %v243
        %v570 = vpop.permute.xlu0 %569
        %v572 = vmul.f32 %v524, %v542
        %v573 = vmul.f32 %v525, %v542
        %v574 = vmul.f32 %v526, %v546
        %v575 = vmul.f32 %v527, %v546
        %v576 = vmul.f32 %v528, %v550
        %v577 = vmul.f32 %v529, %v550
        %v578 = vmul.f32 %v530, %v554
        %v579 = vmul.f32 %v531, %v554
        %v580 = vmul.f32 %v532, %v558
        %v581 = vmul.f32 %v533, %v558
        %v582 = vmul.f32 %v534, %v562
        %v583 = vmul.f32 %v535, %v562
        %v584 = vmul.f32 %v536, %v566
        %v585 = vmul.f32 %v537, %v566
        %v586 = vmul.f32 %v538, %v570
        %v587 = vmul.f32 %v539, %v570
        %v588 = vadd.f32 %v508, %v572
        %v589 = vadd.f32 %v509, %v573
        %v590 = vadd.f32 %v510, %v574
        %v591 = vadd.f32 %v511, %v575
        %v592 = vadd.f32 %v512, %v576
        %v593 = vadd.f32 %v513, %v577
        %v594 = vadd.f32 %v514, %v578
        %v595 = vadd.f32 %v515, %v579
        %v596 = vadd.f32 %v516, %v580
        %v597 = vadd.f32 %v517, %v581
        %v598 = vadd.f32 %v518, %v582
        %v599 = vadd.f32 %v519, %v583
        %v600 = vadd.f32 %v520, %v584
        %v601 = vadd.f32 %v521, %v585
        %v602 = vadd.f32 %v522, %v586
        %v603 = vadd.f32 %v523, %v587
        %604 = vset.pattern.permute.xlu0 2
        %605 = vperm.xlu0 %604, %v236
        %v606 = vpop.permute.xlu0 %605
        %608 = vset.pattern.permute.xlu0 2
        %609 = vperm.xlu0 %608, %v237
        %v610 = vpop.permute.xlu0 %609
        %612 = vset.pattern.permute.xlu0 2
        %613 = vperm.xlu0 %612, %v238
        %v614 = vpop.permute.xlu0 %613
        %616 = vset.pattern.permute.xlu0 2
        %617 = vperm.xlu0 %616, %v239
        %v618 = vpop.permute.xlu0 %617
        %620 = vset.pattern.permute.xlu0 2
        %621 = vperm.xlu0 %620, %v240
        %v622 = vpop.permute.xlu0 %621
        %624 = vset.pattern.permute.xlu0 2
        %625 = vperm.xlu0 %624, %v241
        %v626 = vpop.permute.xlu0 %625
        %628 = vset.pattern.permute.xlu0 2
        %629 = vperm.xlu0 %628, %v242
        %v630 = vpop.permute.xlu0 %629
        %632 = vset.pattern.permute.xlu0 2
        %633 = vperm.xlu0 %632, %v243
        %v634 = vpop.permute.xlu0 %633
        %v636 = vmul.f32 %v588, %v606
        %v637 = vmul.f32 %v589, %v606
        %v638 = vmul.f32 %v590, %v610
        %v639 = vmul.f32 %v591, %v610
        %v640 = vmul.f32 %v592, %v614
        %v641 = vmul.f32 %v593, %v614
        %v642 = vmul.f32 %v594, %v618
        %v643 = vmul.f32 %v595, %v618
        %v644 = vmul.f32 %v596, %v622
        %v645 = vmul.f32 %v597, %v622
        %v646 = vmul.f32 %v598, %v626
        %v647 = vmul.f32 %v599, %v626
        %v648 = vmul.f32 %v600, %v630
        %v649 = vmul.f32 %v601, %v630
        %v650 = vmul.f32 %v602, %v634
        %v651 = vmul.f32 %v603, %v634
        %652 = vset.pattern.permute.xlu0 6
        %653 = vperm.xlu0 %652, %v236
        %v654 = vpop.permute.xlu0 %653
        %656 = vset.pattern.permute.xlu0 6
        %657 = vperm.xlu0 %656, %v237
        %v658 = vpop.permute.xlu0 %657
        %660 = vset.pattern.permute.xlu0 6
        %661 = vperm.xlu0 %660, %v238
        %v662 = vpop.permute.xlu0 %661
        %664 = vset.pattern.permute.xlu0 6
        %665 = vperm.xlu0 %664, %v239
        %v666 = vpop.permute.xlu0 %665
        %668 = vset.pattern.permute.xlu0 6
        %669 = vperm.xlu0 %668, %v240
        %v670 = vpop.permute.xlu0 %669
        %672 = vset.pattern.permute.xlu0 6
        %673 = vperm.xlu0 %672, %v241
        %v674 = vpop.permute.xlu0 %673
        %676 = vset.pattern.permute.xlu0 6
        %677 = vperm.xlu0 %676, %v242
        %v678 = vpop.permute.xlu0 %677
        %680 = vset.pattern.permute.xlu0 6
        %681 = vperm.xlu0 %680, %v243
        %v682 = vpop.permute.xlu0 %681
        %v684 = vadd.f32 %v636, %v654
        %v685 = vadd.f32 %v637, %v654
        %v686 = vadd.f32 %v638, %v658
        %v687 = vadd.f32 %v639, %v658
        %v688 = vadd.f32 %v640, %v662
        %v689 = vadd.f32 %v641, %v662
        %v690 = vadd.f32 %v642, %v666
        %v691 = vadd.f32 %v643, %v666
        %v692 = vadd.f32 %v644, %v670
        %v693 = vadd.f32 %v645, %v670
        %v694 = vadd.f32 %v646, %v674
        %v695 = vadd.f32 %v647, %v674
        %v696 = vadd.f32 %v648, %v678
        %v697 = vadd.f32 %v649, %v678
        %v698 = vadd.f32 %v650, %v682
        %v699 = vadd.f32 %v651, %v682
        %v700 = vtanh.pop %v684
        %v701 = vtanh.pop %v685
        %v702 = vtanh.pop %v686
        %v703 = vtanh.pop %v687
        %v704 = vtanh.pop %v688
        %v705 = vtanh.pop %v689
        %v706 = vtanh.pop %v690
        %v707 = vtanh.pop %v691
        %v708 = vtanh.pop %v692
        %v709 = vtanh.pop %v693
        %v710 = vtanh.pop %v694
        %v711 = vtanh.pop %v695
        %v712 = vtanh.pop %v696
        %v713 = vtanh.pop %v697
        %v714 = vtanh.pop %v698
        %v715 = vtanh.pop %v699
        %716 = vset.pattern.permute.xlu0 10
        %717 = vperm.xlu0 %716, %v236
        %v718 = vpop.permute.xlu0 %717
        %720 = vset.pattern.permute.xlu0 10
        %721 = vperm.xlu0 %720, %v237
        %v722 = vpop.permute.xlu0 %721
        %724 = vset.pattern.permute.xlu0 10
        %725 = vperm.xlu0 %724, %v238
        %v726 = vpop.permute.xlu0 %725
        %728 = vset.pattern.permute.xlu0 10
        %729 = vperm.xlu0 %728, %v239
        %v730 = vpop.permute.xlu0 %729
        %732 = vset.pattern.permute.xlu0 10
        %733 = vperm.xlu0 %732, %v240
        %v734 = vpop.permute.xlu0 %733
        %736 = vset.pattern.permute.xlu0 10
        %737 = vperm.xlu0 %736, %v241
        %v738 = vpop.permute.xlu0 %737
        %740 = vset.pattern.permute.xlu0 10
        %741 = vperm.xlu0 %740, %v242
        %v742 = vpop.permute.xlu0 %741
        %744 = vset.pattern.permute.xlu0 10
        %745 = vperm.xlu0 %744, %v243
        %v746 = vpop.permute.xlu0 %745
        %v748 = vmul.f32 %v700, %v718
        %v749 = vmul.f32 %v701, %v718
        %v750 = vmul.f32 %v702, %v722
        %v751 = vmul.f32 %v703, %v722
        %v752 = vmul.f32 %v704, %v726
        %v753 = vmul.f32 %v705, %v726
        %v754 = vmul.f32 %v706, %v730
        %v755 = vmul.f32 %v707, %v730
        %v756 = vmul.f32 %v708, %v734
        %v757 = vmul.f32 %v709, %v734
        %v758 = vmul.f32 %v710, %v738
        %v759 = vmul.f32 %v711, %v738
        %v760 = vmul.f32 %v712, %v742
        %v761 = vmul.f32 %v713, %v742
        %v762 = vmul.f32 %v714, %v746
        %v763 = vmul.f32 %v715, %v746
        %v764 = vadd.f32 %v684, %v748
        %v765 = vadd.f32 %v685, %v749
        %v766 = vadd.f32 %v686, %v750
        %v767 = vadd.f32 %v687, %v751
        %v768 = vadd.f32 %v688, %v752
        %v769 = vadd.f32 %v689, %v753
        %v770 = vadd.f32 %v690, %v754
        %v771 = vadd.f32 %v691, %v755
        %v772 = vadd.f32 %v692, %v756
        %v773 = vadd.f32 %v693, %v757
        %v774 = vadd.f32 %v694, %v758
        %v775 = vadd.f32 %v695, %v759
        %v776 = vadd.f32 %v696, %v760
        %v777 = vadd.f32 %v697, %v761
        %v778 = vadd.f32 %v698, %v762
        %v779 = vadd.f32 %v699, %v763
        %780 = vset.pattern.permute.xlu0 3
        %781 = vperm.xlu0 %780, %v236
        %v782 = vpop.permute.xlu0 %781
        %784 = vset.pattern.permute.xlu0 3
        %785 = vperm.xlu0 %784, %v237
        %v786 = vpop.permute.xlu0 %785
        %788 = vset.pattern.permute.xlu0 3
        %789 = vperm.xlu0 %788, %v238
        %v790 = vpop.permute.xlu0 %789
        %792 = vset.pattern.permute.xlu0 3
        %793 = vperm.xlu0 %792, %v239
        %v794 = vpop.permute.xlu0 %793
        %796 = vset.pattern.permute.xlu0 3
        %797 = vperm.xlu0 %796, %v240
        %v798 = vpop.permute.xlu0 %797
        %800 = vset.pattern.permute.xlu0 3
        %801 = vperm.xlu0 %800, %v241
        %v802 = vpop.permute.xlu0 %801
        %804 = vset.pattern.permute.xlu0 3
        %805 = vperm.xlu0 %804, %v242
        %v806 = vpop.permute.xlu0 %805
        %808 = vset.pattern.permute.xlu0 3
        %809 = vperm.xlu0 %808, %v243
        %v810 = vpop.permute.xlu0 %809
        %v812 = vmul.f32 %v764, %v782
        %v813 = vmul.f32 %v765, %v782
        %v814 = vmul.f32 %v766, %v786
        %v815 = vmul.f32 %v767, %v786
        %v816 = vmul.f32 %v768, %v790
        %v817 = vmul.f32 %v769, %v790
        %v818 = vmul.f32 %v770, %v794
        %v819 = vmul.f32 %v771, %v794
        %v820 = vmul.f32 %v772, %v798
        %v821 = vmul.f32 %v773, %v798
        %v822 = vmul.f32 %v774, %v802
        %v823 = vmul.f32 %v775, %v802
        %v824 = vmul.f32 %v776, %v806
        %v825 = vmul.f32 %v777, %v806
        %v826 = vmul.f32 %v778, %v810
        %v827 = vmul.f32 %v779, %v810
        %828 = vset.pattern.permute.xlu0 7
        %829 = vperm.xlu0 %828, %v236
        %v830 = vpop.permute.xlu0 %829
        %832 = vset.pattern.permute.xlu0 7
        %833 = vperm.xlu0 %832, %v237
        %v834 = vpop.permute.xlu0 %833
        %836 = vset.pattern.permute.xlu0 7
        %837 = vperm.xlu0 %836, %v238
        %v838 = vpop.permute.xlu0 %837
        %840 = vset.pattern.permute.xlu0 7
        %841 = vperm.xlu0 %840, %v239
        %v842 = vpop.permute.xlu0 %841
        %844 = vset.pattern.permute.xlu0 7
        %845 = vperm.xlu0 %844, %v240
        %v846 = vpop.permute.xlu0 %845
        %848 = vset.pattern.permute.xlu0 7
        %849 = vperm.xlu0 %848, %v241
        %v850 = vpop.permute.xlu0 %849
        %852 = vset.pattern.permute.xlu0 7
        %853 = vperm.xlu0 %852, %v242
        %v854 = vpop.permute.xlu0 %853
        %856 = vset.pattern.permute.xlu0 7
        %857 = vperm.xlu0 %856, %v243
        %v858 = vpop.permute.xlu0 %857
        %v860 = vadd.f32 %v812, %v830
        %v861 = vadd.f32 %v813, %v830
        %v862 = vadd.f32 %v814, %v834
        %v863 = vadd.f32 %v815, %v834
        %v864 = vadd.f32 %v816, %v838
        %v865 = vadd.f32 %v817, %v838
        %v866 = vadd.f32 %v818, %v842
        %v867 = vadd.f32 %v819, %v842
        %v868 = vadd.f32 %v820, %v846
        %v869 = vadd.f32 %v821, %v846
        %v870 = vadd.f32 %v822, %v850
        %v871 = vadd.f32 %v823, %v850
        %v872 = vadd.f32 %v824, %v854
        %v873 = vadd.f32 %v825, %v854
        %v874 = vadd.f32 %v826, %v858
        %v875 = vadd.f32 %v827, %v858
        %v876 = vmul.f32 %v860, 0.5
        %v877 = vmul.f32 %v861, 0.5
        %v878 = vmul.f32 %v862, 0.5
        %v879 = vmul.f32 %v863, 0.5
        %v880 = vmul.f32 %v864, 0.5
        %v881 = vmul.f32 %v865, 0.5
        %v882 = vmul.f32 %v866, 0.5
        %v883 = vmul.f32 %v867, 0.5
        %v884 = vmul.f32 %v868, 0.5
        %v885 = vmul.f32 %v869, 0.5
        %v886 = vmul.f32 %v870, 0.5
        %v887 = vmul.f32 %v871, 0.5
        %v888 = vmul.f32 %v872, 0.5
        %v889 = vmul.f32 %v873, 0.5
        %v890 = vmul.f32 %v874, 0.5
        %v891 = vmul.f32 %v875, 0.5
        %v892 = vtanh.pop %v876
        %v893 = vtanh.pop %v877
        %v894 = vtanh.pop %v878
        %v895 = vtanh.pop %v879
        %v896 = vtanh.pop %v880
        %v897 = vtanh.pop %v881
        %v898 = vtanh.pop %v882
        %v899 = vtanh.pop %v883
        %v900 = vtanh.pop %v884
        %v901 = vtanh.pop %v885
        %v902 = vtanh.pop %v886
        %v903 = vtanh.pop %v887
        %v904 = vtanh.pop %v888
        %v905 = vtanh.pop %v889
        %v906 = vtanh.pop %v890
        %v907 = vtanh.pop %v891
        %v908 = vadd.f32 %v892, 1.0
        %v909 = vadd.f32 %v893, 1.0
        %v910 = vadd.f32 %v894, 1.0
        %v911 = vadd.f32 %v895, 1.0
        %v912 = vadd.f32 %v896, 1.0
        %v913 = vadd.f32 %v897, 1.0
        %v914 = vadd.f32 %v898, 1.0
        %v915 = vadd.f32 %v899, 1.0
        %v916 = vadd.f32 %v900, 1.0
        %v917 = vadd.f32 %v901, 1.0
        %v918 = vadd.f32 %v902, 1.0
        %v919 = vadd.f32 %v903, 1.0
        %v920 = vadd.f32 %v904, 1.0
        %v921 = vadd.f32 %v905, 1.0
        %v922 = vadd.f32 %v906, 1.0
        %v923 = vadd.f32 %v907, 1.0
        %v924 = vmul.f32 %v908, 0.5
        %v925 = vmul.f32 %v909, 0.5
        %v926 = vmul.f32 %v910, 0.5
        %v927 = vmul.f32 %v911, 0.5
        %v928 = vmul.f32 %v912, 0.5
        %v929 = vmul.f32 %v913, 0.5
        %v930 = vmul.f32 %v914, 0.5
        %v931 = vmul.f32 %v915, 0.5
        %v932 = vmul.f32 %v916, 0.5
        %v933 = vmul.f32 %v917, 0.5
        %v934 = vmul.f32 %v918, 0.5
        %v935 = vmul.f32 %v919, 0.5
        %v936 = vmul.f32 %v920, 0.5
        %v937 = vmul.f32 %v921, 0.5
        %v938 = vmul.f32 %v922, 0.5
        %v939 = vmul.f32 %v923, 0.5
        %940 = vst [vmem:[%s209] sm:$0xff] %v924
        %941 = vst [vmem:[%s209 + $0x8] sm:$0xff] %v925
        %942 = vst [vmem:[%s209 + $0x10] sm:$0xff] %v926
        %943 = vst [vmem:[%s209 + $0x18] sm:$0xff] %v927
        %944 = vst [vmem:[%s209 + $0x20] sm:$0xff] %v928
        %945 = vst [vmem:[%s209 + $0x28] sm:$0xff] %v929
        %946 = vst [vmem:[%s209 + $0x30] sm:$0xff] %v930
        %947 = vst [vmem:[%s209 + $0x38] sm:$0xff] %v931
        %948 = vst [vmem:[%s209 + $0x40] sm:$0xff] %v932
        %949 = vst [vmem:[%s209 + $0x48] sm:$0xff] %v933
        %950 = vst [vmem:[%s209 + $0x50] sm:$0xff] %v934
        %951 = vst [vmem:[%s209 + $0x58] sm:$0xff] %v935
        %952 = vst [vmem:[%s209 + $0x60] sm:$0xff] %v936
        %953 = vst [vmem:[%s209 + $0x68] sm:$0xff] %v937
        %954 = vst [vmem:[%s209 + $0x70] sm:$0xff] %v938
        %955 = vst [vmem:[%s209 + $0x78] sm:$0xff] %v939
        %s956 = sand.u32 %s106, 1
        %s957 = scalar_lea.sflag [#allocation4], %s956
        %s958 = sand.u32 %s106, 1
        %s959 = smul.addr %s958, 128
        %s960 = scalar_lea.vmem [#allocation5], %s959
        // Predicated region
        $region33: #{tpu_custom_call.1} parent=27 // pred_check
          %p961 = pneg %p116
        $region34: #{tpu_custom_call.1} parent=27 // pred_check_branch
          %963 = sbr.rel (%p961) target = $region36
        $region35: #{tpu_custom_call.1} parent=27 // pred_region
          %s964 = smul.u32 8, %s25
          %s965 = smul.u32 2, %s26
          %s967 = ssub.s32 2048, 2048
          %968 = vsyncadd %s957, %s967
          %s969 = smul.addr %s964, 2
          %s970 = sadd.s32 %s965, %s969
          %s971 = smul.addr %s24, 16
          %s972 = sadd.s32 %s970, %s971
          %s973 = smul.addr %s972, 128
          %s974 = scalar_lea.hbm %s2, %s973
          %s975 = sshll.u32 %s960, 4
          %s976 = int_to_ptr.vmem [resolvable:$true] %s975
          %981 = dma.vmem_to_hbm [thread:$0]  %s976, 2048, %s974, %s957, 256, 256, 16
        $region36: #{tpu_custom_call.1} parent=27 // pred_fallthru
          _
      $region28: #{tpu_custom_call.1} parent=5 // pred_fallthru
        _
      %p982 = scmp.le.s32.totalorder 2, %s14
      // Predicated region
      $region37: #{tpu_custom_call.1} parent=5 // pred_check
        %p983 = pneg %p982
      $region38: #{tpu_custom_call.1} parent=5 // pred_check_branch
        %985 = sbr.rel (%p983) target = $region40
      $region39: #{tpu_custom_call.1} parent=5 // pred_region
        %s986 = ssub.s32 %s14, 2
        // Predicated region
        $region41: #{tpu_custom_call.1} parent=39 // pred_check
          %p987 = pneg %p122
        $region42: #{tpu_custom_call.1} parent=39 // pred_check_branch
          %989 = sbr.rel (%p987) target = $region44
        $region43: #{tpu_custom_call.1} parent=39 // pred_region
          %s990 = sand.u32 %s107, 1
          %s991 = scalar_lea.sflag [#allocation4], %s990
          %s992 = sand.u32 %s107, 1
          %s993 = smul.addr %s992, 128
          %s994 = scalar_lea.vmem [#allocation5], %s993
          %995 = dma.done %s991, 2048
        $region44: #{tpu_custom_call.1} parent=39 // pred_fallthru
          _
      $region40: #{tpu_custom_call.1} parent=5 // pred_fallthru
        _
    $region6: #{tpu_custom_call.1} parent=1 // loop_footer
      %s18 = sadd.s32 1, %s14
    $region7: #{tpu_custom_call.1} parent=1 // loop_footer_branch
      %13 = sbr.rel target = $region3
    $region8: #{tpu_custom_call.1} parent=1 // loop_exit
      _
    %996 = vsyncpa [#allocation3], 1
    %s997 = scalar_lea.sflag [#allocation3], 1
    %998 = vsyncpa %s997, 1
    %999 = vsyncpa [#allocation4], 1
    %s1000 = scalar_lea.sflag [#allocation4], 1
    %1001 = vsyncpa %s1000, 1

</llo_original>
